<compile_context>
chip_gen: v5e
topology: v5e:2x2
jax: 0.10.0
libtpu: 0.0.40
codegen_flags: <defaults>
</compile_context>

<pallas_src>
import functools
import math

import jax
import jax.numpy as jnp
from jax import lax
from jax.experimental import pallas as pl
from jax.experimental.pallas import tpu as pltpu

LN_EPS = 1e-6


def _attention_subblock_kernel(x_ref, gamma_ref, beta_ref, wqkv_ref, bqkv_ref,
                               wo_ref, bo_ref, o_ref, *, num_heads):
    # x_ref: (1, S, D) block holding one batch element.
    x = x_ref[0].astype(jnp.float32)                       # (S, D)
    S, D = x.shape
    head_dim = D // num_heads
    scale = 1.0 / math.sqrt(head_dim)

    # ---- LayerNorm (biased variance, eps=1e-6, affine), f32 statistics ----
    mean = jnp.mean(x, axis=-1, keepdims=True)
    xc = x - mean
    var = jnp.mean(xc * xc, axis=-1, keepdims=True)
    xn = xc * lax.rsqrt(var + LN_EPS)
    xn = xn * gamma_ref[...].astype(jnp.float32) + beta_ref[...].astype(jnp.float32)

    # ---- Fused QKV projection: bf16 operands -> MXU, f32 accumulation ----
    qkv = jnp.dot(xn.astype(jnp.bfloat16),
                  wqkv_ref[...].astype(jnp.bfloat16),
                  preferred_element_type=jnp.float32)       # (S, 3D) f32
    qkv = qkv + bqkv_ref[...].astype(jnp.float32)

    q = qkv[:, 0:D] * scale            # fold 1/sqrt(head_dim) into q (f32)
    k = qkv[:, D:2 * D]
    v = qkv[:, 2 * D:3 * D]

    # ---- Per-head softmax attention (static, unrolled over heads) ----
    head_outs = []
    for h in range(num_heads):
        sl = slice(h * head_dim, (h + 1) * head_dim)
        q_h = q[:, sl].astype(jnp.bfloat16)                 # (S, hd)
        k_ht = k[:, sl].T.astype(jnp.bfloat16)              # (hd, S)
        v_h = v[:, sl].astype(jnp.bfloat16)                 # (S, hd)

        s = jnp.dot(q_h, k_ht, preferred_element_type=jnp.float32)   # (S, S) f32
        m = jnp.max(s, axis=-1, keepdims=True)
        e = jnp.exp(s - m)
        inv = pl.reciprocal(jnp.sum(e, axis=-1, keepdims=True), approx=True)
        p = (e * inv).astype(jnp.bfloat16)

        head_outs.append(
            jnp.dot(p, v_h, preferred_element_type=jnp.float32))      # (S, hd) f32

    ctx = jnp.concatenate(head_outs, axis=-1)               # (S, D) f32

    # ---- Output projection ----
    out = jnp.dot(ctx.astype(jnp.bfloat16),
                  wo_ref[...].astype(jnp.bfloat16),
                  preferred_element_type=jnp.float32)
    out = out + bo_ref[...].astype(jnp.float32)

    o_ref[0] = out.astype(o_ref.dtype)


def attention_subblock(x, gamma, beta, w_qkv, b_qkv, w_out, b_out, *, num_heads):
    """Pre-LN multi-head self-attention.  x: (B, S, D) -> (B, S, D).

    Weight layouts (already transposed vs. PyTorch):
      w_qkv: (D, 3D) = in_proj_weight.T      b_qkv: (3D,)
      w_out: (D, D)  = out_proj.weight.T     b_out: (D,)
    """
    B, S, D = x.shape
    assert D % num_heads == 0, "dim must be divisible by num_heads"
    assert w_qkv.shape == (D, 3 * D) and w_out.shape == (D, D)

    gamma2 = gamma.reshape(1, D)
    beta2 = beta.reshape(1, D)
    bqkv2 = b_qkv.reshape(1, 3 * D)
    bo2 = b_out.reshape(1, D)

    kernel = functools.partial(_attention_subblock_kernel, num_heads=num_heads)

    return pl.pallas_call(
        kernel,
        out_shape=jax.ShapeDtypeStruct((B, S, D), x.dtype),
        grid_spec=pltpu.PrefetchScalarGridSpec(
            num_scalar_prefetch=0,
            grid=(B,),
            in_specs=[
                pl.BlockSpec((1, S, D), lambda b: (b, 0, 0)),    # x, one batch elem
                pl.BlockSpec((1, D), lambda b: (0, 0)),          # gamma   (resident)
                pl.BlockSpec((1, D), lambda b: (0, 0)),          # beta    (resident)
                pl.BlockSpec((D, 3 * D), lambda b: (0, 0)),      # w_qkv   (resident)
                pl.BlockSpec((1, 3 * D), lambda b: (0, 0)),      # b_qkv   (resident)
                pl.BlockSpec((D, D), lambda b: (0, 0)),          # w_out   (resident)
                pl.BlockSpec((1, D), lambda b: (0, 0)),          # b_out   (resident)
            ],
            out_specs=pl.BlockSpec((1, S, D), lambda b: (b, 0, 0)),
        ),
        compiler_params=pltpu.CompilerParams(
            dimension_semantics=("parallel",)),   # v7x: 2 TCs split the batch
    )(x, gamma2, beta2, w_qkv, bqkv2, w_out, bo2)


def _ref_attention_subblock(x, gamma, beta, w_qkv, b_qkv, w_out, b_out, num_heads):
    """Pure-JAX f32 reference matching nn.LayerNorm + nn.MultiheadAttention."""
    B, S, D = x.shape
    hd = D // num_heads
    mean = jnp.mean(x, axis=-1, keepdims=True)
    var = jnp.mean((x - mean) ** 2, axis=-1, keepdims=True)
    xn = (x - mean) * lax.rsqrt(var + LN_EPS) * gamma + beta
    qkv = xn @ w_qkv + b_qkv                                     # (B, S, 3D)
    q, k, v = jnp.split(qkv, 3, axis=-1)
    q = q.reshape(B, S, num_heads, hd).transpose(0, 2, 1, 3)     # (B, nh, S, hd)
    k = k.reshape(B, S, num_heads, hd).transpose(0, 2, 1, 3)
    v = v.reshape(B, S, num_heads, hd).transpose(0, 2, 1, 3)
    scores = (q @ jnp.swapaxes(k, -1, -2)) / math.sqrt(hd)       # (B, nh, S, S)
    p = jax.nn.softmax(scores, axis=-1)
    ctx = (p @ v).transpose(0, 2, 1, 3).reshape(B, S, D)
    return ctx @ w_out + b_out


if __name__ == "__main__":
    # Small shapes consistent with the module: dim=128, num_heads=4, seq=8, batch=2.
    B, S, D = 2, 8, 128
    NUM_HEADS = 4

    key = jax.random.PRNGKey(0)
    kx, kg, kb, k1, k2, k3, k4 = jax.random.split(key, 7)

    x = jax.random.normal(kx, (B, S, D), dtype=jnp.float32)

    # Deterministic parameter init (PyTorch-like scales, not checkpoint values).
    gamma = 1.0 + 0.1 * jax.random.normal(kg, (D,), jnp.float32)
    beta = 0.1 * jax.random.normal(kb, (D,), jnp.float32)
    bound_in = 1.0 / math.sqrt(D)
    w_qkv = jax.random.uniform(k1, (D, 3 * D), jnp.float32, -bound_in, bound_in)
    b_qkv = jax.random.uniform(k2, (3 * D,), jnp.float32, -bound_in, bound_in)
    w_out = jax.random.uniform(k3, (D, D), jnp.float32, -bound_in, bound_in)
    b_out = jax.random.uniform(k4, (D,), jnp.float32, -bound_in, bound_in)

    out = attention_subblock(x, gamma, beta, w_qkv, b_qkv, w_out, b_out,
                             num_heads=NUM_HEADS)
    out = jax.block_until_ready(out)

    ref = _ref_attention_subblock(x, gamma, beta, w_qkv, b_qkv, w_out, b_out,
                                  NUM_HEADS)
    assert out.shape == (B, S, D)
    # bf16 MXU operands (f32 accumulation) vs f32 reference -> loosened tolerance.
    assert jnp.allclose(out, ref, atol=2e-2, rtol=2e-2), (
        float(jnp.max(jnp.abs(out - ref))))

    print("KERNEL_OK")
</pallas_src>

<mosaic_0001>
module attributes {stable_mosaic.version = 11 : i64} {
  func.func @_attention_subblock_kernel(%arg0: i32, %arg1: memref<1x8x128xf32, #tpu.memory_space<vmem>>, %arg2: memref<1x128xf32, #tpu.memory_space<vmem>>, %arg3: memref<1x128xf32, #tpu.memory_space<vmem>>, %arg4: memref<128x384xf32, #tpu.memory_space<vmem>>, %arg5: memref<1x384xf32, #tpu.memory_space<vmem>>, %arg6: memref<128x128xf32, #tpu.memory_space<vmem>>, %arg7: memref<1x128xf32, #tpu.memory_space<vmem>>, %arg8: memref<1x8x128xf32, #tpu.memory_space<vmem>>) attributes {dimension_semantics = [#tpu.dimension_semantics<parallel>], iteration_bounds = array<i64: 2>, scalar_prefetch = 0 : i64, scratch_operands = 0 : i64, tpu.core_type = #tpu.core_type<tc>, window_params = [{transform_indices = @transform_0, window_bounds = array<i64: 1, 8, 128>}, {pipeline_mode = #tpu.pipeline_mode<synchronous>, transform_indices = @transform_1, window_bounds = array<i64: 1, 128>}, {pipeline_mode = #tpu.pipeline_mode<synchronous>, transform_indices = @transform_2, window_bounds = array<i64: 1, 128>}, {pipeline_mode = #tpu.pipeline_mode<synchronous>, transform_indices = @transform_3, window_bounds = array<i64: 128, 384>}, {pipeline_mode = #tpu.pipeline_mode<synchronous>, transform_indices = @transform_4, window_bounds = array<i64: 1, 384>}, {pipeline_mode = #tpu.pipeline_mode<synchronous>, transform_indices = @transform_5, window_bounds = array<i64: 128, 128>}, {pipeline_mode = #tpu.pipeline_mode<synchronous>, transform_indices = @transform_6, window_bounds = array<i64: 1, 128>}, {transform_indices = @transform_7, window_bounds = array<i64: 1, 8, 128>}]} {
    %c0 = arith.constant 0 : index
    %c0_0 = arith.constant 0 : index
    %c0_1 = arith.constant 0 : index
    %0 = vector.load %arg1[%c0, %c0_0, %c0_1] : memref<1x8x128xf32, #tpu.memory_space<vmem>>, vector<1x8x128xf32>
    %1 = vector.shape_cast %0 : vector<1x8x128xf32> to vector<8x128xf32>
    %cst = arith.constant dense<0.000000e+00> : vector<8xf32>
    %2 = vector.multi_reduction <add>, %1, %cst [1] : vector<8x128xf32> to vector<8xf32>
    %3 = vector.shape_cast %2 : vector<8xf32> to vector<8x1xf32>
    %cst_2 = arith.constant 1.280000e+02 : f32
    %4 = vector.broadcast %cst_2 : f32 to vector<8x1xf32>
    %5 = arith.divf %3, %4 : vector<8x1xf32>
    %6 = vector.broadcast %5 : vector<8x1xf32> to vector<8x128xf32>
    %7 = arith.subf %1, %6 : vector<8x128xf32>
    %8 = arith.mulf %7, %7 : vector<8x128xf32>
    %cst_3 = arith.constant dense<0.000000e+00> : vector<8xf32>
    %9 = vector.multi_reduction <add>, %8, %cst_3 [1] : vector<8x128xf32> to vector<8xf32>
    %10 = vector.shape_cast %9 : vector<8xf32> to vector<8x1xf32>
    %cst_4 = arith.constant 1.280000e+02 : f32
    %11 = vector.broadcast %cst_4 : f32 to vector<8x1xf32>
    %12 = arith.divf %10, %11 : vector<8x1xf32>
    %cst_5 = arith.constant 9.99999997E-7 : f32
    %13 = vector.broadcast %cst_5 : f32 to vector<8x1xf32>
    %14 = arith.addf %12, %13 : vector<8x1xf32>
    %15 = math.rsqrt %14 : vector<8x1xf32>
    %16 = vector.broadcast %15 : vector<8x1xf32> to vector<8x128xf32>
    %17 = arith.mulf %7, %16 : vector<8x128xf32>
    %c0_6 = arith.constant 0 : index
    %c0_7 = arith.constant 0 : index
    %18 = vector.load %arg2[%c0_6, %c0_7] : memref<1x128xf32, #tpu.memory_space<vmem>>, vector<1x128xf32>
    %19 = vector.broadcast %18 : vector<1x128xf32> to vector<8x128xf32>
    %20 = arith.mulf %17, %19 : vector<8x128xf32>
    %c0_8 = arith.constant 0 : index
    %c0_9 = arith.constant 0 : index
    %21 = vector.load %arg3[%c0_8, %c0_9] : memref<1x128xf32, #tpu.memory_space<vmem>>, vector<1x128xf32>
    %22 = vector.broadcast %21 : vector<1x128xf32> to vector<8x128xf32>
    %23 = arith.addf %20, %22 : vector<8x128xf32>
    %24 = arith.truncf %23 : vector<8x128xf32> to vector<8x128xbf16>
    %c0_10 = arith.constant 0 : index
    %c0_11 = arith.constant 0 : index
    %25 = vector.load %arg4[%c0_10, %c0_11] : memref<128x384xf32, #tpu.memory_space<vmem>>, vector<128x384xf32>
    %26 = arith.truncf %25 : vector<128x384xf32> to vector<128x384xbf16>
    %cst_12 = arith.constant dense<0.000000e+00> : vector<8x384xf32>
    %27 = tpu.matmul %24, %26, %cst_12 {dimension_numbers = #tpu.dot_dimension_numbers<[1], [0], [0], [1], [0, 0, 1, 1], [], []>} : vector<8x128xbf16>, vector<128x384xbf16>, vector<8x384xf32> -> vector<8x384xf32>
    %c0_13 = arith.constant 0 : index
    %c0_14 = arith.constant 0 : index
    %28 = vector.load %arg5[%c0_13, %c0_14] : memref<1x384xf32, #tpu.memory_space<vmem>>, vector<1x384xf32>
    %29 = vector.broadcast %28 : vector<1x384xf32> to vector<8x384xf32>
    %30 = arith.addf %27, %29 : vector<8x384xf32>
    %31 = vector.extract_strided_slice %30 {offsets = [0, 0], sizes = [8, 128], strides = [1, 1]} : vector<8x384xf32> to vector<8x128xf32>
    %cst_15 = arith.constant 0.176776692 : f32
    %32 = vector.broadcast %cst_15 : f32 to vector<8x128xf32>
    %33 = arith.mulf %31, %32 : vector<8x128xf32>
    %34 = vector.extract_strided_slice %30 {offsets = [0, 128], sizes = [8, 128], strides = [1, 1]} : vector<8x384xf32> to vector<8x128xf32>
    %35 = vector.extract_strided_slice %30 {offsets = [0, 256], sizes = [8, 128], strides = [1, 1]} : vector<8x384xf32> to vector<8x128xf32>
    %36 = vector.extract_strided_slice %33 {offsets = [0, 0], sizes = [8, 32], strides = [1, 1]} : vector<8x128xf32> to vector<8x32xf32>
    %37 = arith.truncf %36 : vector<8x32xf32> to vector<8x32xbf16>
    %38 = vector.extract_strided_slice %34 {offsets = [0, 0], sizes = [8, 32], strides = [1, 1]} : vector<8x128xf32> to vector<8x32xf32>
    %39 = tpu.transpose %38, [1, 0] : vector<8x32xf32> -> vector<32x8xf32>
    %40 = arith.truncf %39 : vector<32x8xf32> to vector<32x8xbf16>
    %41 = vector.extract_strided_slice %35 {offsets = [0, 0], sizes = [8, 32], strides = [1, 1]} : vector<8x128xf32> to vector<8x32xf32>
    %42 = arith.truncf %41 : vector<8x32xf32> to vector<8x32xbf16>
    %cst_16 = arith.constant dense<0.000000e+00> : vector<8x8xf32>
    %43 = tpu.matmul %37, %40, %cst_16 {dimension_numbers = #tpu.dot_dimension_numbers<[1], [0], [0], [1], [0, 0, 1, 1], [], []>} : vector<8x32xbf16>, vector<32x8xbf16>, vector<8x8xf32> -> vector<8x8xf32>
    %cst_17 = arith.constant dense<0xFF800000> : vector<8xf32>
    %44 = vector.multi_reduction <maximumf>, %43, %cst_17 [1] : vector<8x8xf32> to vector<8xf32>
    %45 = vector.shape_cast %44 : vector<8xf32> to vector<8x1xf32>
    %46 = vector.broadcast %45 : vector<8x1xf32> to vector<8x8xf32>
    %47 = arith.subf %43, %46 : vector<8x8xf32>
    %48 = math.exp %47 : vector<8x8xf32>
    %cst_18 = arith.constant dense<0.000000e+00> : vector<8xf32>
    %49 = vector.multi_reduction <add>, %48, %cst_18 [1] : vector<8x8xf32> to vector<8xf32>
    %50 = vector.shape_cast %49 : vector<8xf32> to vector<8x1xf32>
    %51 = tpu.reciprocal %50 {approx = true} : vector<8x1xf32> -> vector<8x1xf32>
    %52 = vector.broadcast %51 : vector<8x1xf32> to vector<8x8xf32>
    %53 = arith.mulf %48, %52 : vector<8x8xf32>
    %54 = arith.truncf %53 : vector<8x8xf32> to vector<8x8xbf16>
    %cst_19 = arith.constant dense<0.000000e+00> : vector<8x32xf32>
    %55 = tpu.matmul %54, %42, %cst_19 {dimension_numbers = #tpu.dot_dimension_numbers<[1], [0], [0], [1], [0, 0, 1, 1], [], []>} : vector<8x8xbf16>, vector<8x32xbf16>, vector<8x32xf32> -> vector<8x32xf32>
    %56 = vector.extract_strided_slice %33 {offsets = [0, 32], sizes = [8, 32], strides = [1, 1]} : vector<8x128xf32> to vector<8x32xf32>
    %57 = arith.truncf %56 : vector<8x32xf32> to vector<8x32xbf16>
    %58 = vector.extract_strided_slice %34 {offsets = [0, 32], sizes = [8, 32], strides = [1, 1]} : vector<8x128xf32> to vector<8x32xf32>
    %59 = tpu.transpose %58, [1, 0] : vector<8x32xf32> -> vector<32x8xf32>
    %60 = arith.truncf %59 : vector<32x8xf32> to vector<32x8xbf16>
    %61 = vector.extract_strided_slice %35 {offsets = [0, 32], sizes = [8, 32], strides = [1, 1]} : vector<8x128xf32> to vector<8x32xf32>
    %62 = arith.truncf %61 : vector<8x32xf32> to vector<8x32xbf16>
    %cst_20 = arith.constant dense<0.000000e+00> : vector<8x8xf32>
    %63 = tpu.matmul %57, %60, %cst_20 {dimension_numbers = #tpu.dot_dimension_numbers<[1], [0], [0], [1], [0, 0, 1, 1], [], []>} : vector<8x32xbf16>, vector<32x8xbf16>, vector<8x8xf32> -> vector<8x8xf32>
    %cst_21 = arith.constant dense<0xFF800000> : vector<8xf32>
    %64 = vector.multi_reduction <maximumf>, %63, %cst_21 [1] : vector<8x8xf32> to vector<8xf32>
    %65 = vector.shape_cast %64 : vector<8xf32> to vector<8x1xf32>
    %66 = vector.broadcast %65 : vector<8x1xf32> to vector<8x8xf32>
    %67 = arith.subf %63, %66 : vector<8x8xf32>
    %68 = math.exp %67 : vector<8x8xf32>
    %cst_22 = arith.constant dense<0.000000e+00> : vector<8xf32>
    %69 = vector.multi_reduction <add>, %68, %cst_22 [1] : vector<8x8xf32> to vector<8xf32>
    %70 = vector.shape_cast %69 : vector<8xf32> to vector<8x1xf32>
    %71 = tpu.reciprocal %70 {approx = true} : vector<8x1xf32> -> vector<8x1xf32>
    %72 = vector.broadcast %71 : vector<8x1xf32> to vector<8x8xf32>
    %73 = arith.mulf %68, %72 : vector<8x8xf32>
    %74 = arith.truncf %73 : vector<8x8xf32> to vector<8x8xbf16>
    %cst_23 = arith.constant dense<0.000000e+00> : vector<8x32xf32>
    %75 = tpu.matmul %74, %62, %cst_23 {dimension_numbers = #tpu.dot_dimension_numbers<[1], [0], [0], [1], [0, 0, 1, 1], [], []>} : vector<8x8xbf16>, vector<8x32xbf16>, vector<8x32xf32> -> vector<8x32xf32>
    %76 = vector.extract_strided_slice %33 {offsets = [0, 64], sizes = [8, 32], strides = [1, 1]} : vector<8x128xf32> to vector<8x32xf32>
    %77 = arith.truncf %76 : vector<8x32xf32> to vector<8x32xbf16>
    %78 = vector.extract_strided_slice %34 {offsets = [0, 64], sizes = [8, 32], strides = [1, 1]} : vector<8x128xf32> to vector<8x32xf32>
    %79 = tpu.transpose %78, [1, 0] : vector<8x32xf32> -> vector<32x8xf32>
    %80 = arith.truncf %79 : vector<32x8xf32> to vector<32x8xbf16>
    %81 = vector.extract_strided_slice %35 {offsets = [0, 64], sizes = [8, 32], strides = [1, 1]} : vector<8x128xf32> to vector<8x32xf32>
    %82 = arith.truncf %81 : vector<8x32xf32> to vector<8x32xbf16>
    %cst_24 = arith.constant dense<0.000000e+00> : vector<8x8xf32>
    %83 = tpu.matmul %77, %80, %cst_24 {dimension_numbers = #tpu.dot_dimension_numbers<[1], [0], [0], [1], [0, 0, 1, 1], [], []>} : vector<8x32xbf16>, vector<32x8xbf16>, vector<8x8xf32> -> vector<8x8xf32>
    %cst_25 = arith.constant dense<0xFF800000> : vector<8xf32>
    %84 = vector.multi_reduction <maximumf>, %83, %cst_25 [1] : vector<8x8xf32> to vector<8xf32>
    %85 = vector.shape_cast %84 : vector<8xf32> to vector<8x1xf32>
    %86 = vector.broadcast %85 : vector<8x1xf32> to vector<8x8xf32>
    %87 = arith.subf %83, %86 : vector<8x8xf32>
    %88 = math.exp %87 : vector<8x8xf32>
    %cst_26 = arith.constant dense<0.000000e+00> : vector<8xf32>
    %89 = vector.multi_reduction <add>, %88, %cst_26 [1] : vector<8x8xf32> to vector<8xf32>
    %90 = vector.shape_cast %89 : vector<8xf32> to vector<8x1xf32>
    %91 = tpu.reciprocal %90 {approx = true} : vector<8x1xf32> -> vector<8x1xf32>
    %92 = vector.broadcast %91 : vector<8x1xf32> to vector<8x8xf32>
    %93 = arith.mulf %88, %92 : vector<8x8xf32>
    %94 = arith.truncf %93 : vector<8x8xf32> to vector<8x8xbf16>
    %cst_27 = arith.constant dense<0.000000e+00> : vector<8x32xf32>
    %95 = tpu.matmul %94, %82, %cst_27 {dimension_numbers = #tpu.dot_dimension_numbers<[1], [0], [0], [1], [0, 0, 1, 1], [], []>} : vector<8x8xbf16>, vector<8x32xbf16>, vector<8x32xf32> -> vector<8x32xf32>
    %96 = vector.extract_strided_slice %33 {offsets = [0, 96], sizes = [8, 32], strides = [1, 1]} : vector<8x128xf32> to vector<8x32xf32>
    %97 = arith.truncf %96 : vector<8x32xf32> to vector<8x32xbf16>
    %98 = vector.extract_strided_slice %34 {offsets = [0, 96], sizes = [8, 32], strides = [1, 1]} : vector<8x128xf32> to vector<8x32xf32>
    %99 = tpu.transpose %98, [1, 0] : vector<8x32xf32> -> vector<32x8xf32>
    %100 = arith.truncf %99 : vector<32x8xf32> to vector<32x8xbf16>
    %101 = vector.extract_strided_slice %35 {offsets = [0, 96], sizes = [8, 32], strides = [1, 1]} : vector<8x128xf32> to vector<8x32xf32>
    %102 = arith.truncf %101 : vector<8x32xf32> to vector<8x32xbf16>
    %cst_28 = arith.constant dense<0.000000e+00> : vector<8x8xf32>
    %103 = tpu.matmul %97, %100, %cst_28 {dimension_numbers = #tpu.dot_dimension_numbers<[1], [0], [0], [1], [0, 0, 1, 1], [], []>} : vector<8x32xbf16>, vector<32x8xbf16>, vector<8x8xf32> -> vector<8x8xf32>
    %cst_29 = arith.constant dense<0xFF800000> : vector<8xf32>
    %104 = vector.multi_reduction <maximumf>, %103, %cst_29 [1] : vector<8x8xf32> to vector<8xf32>
    %105 = vector.shape_cast %104 : vector<8xf32> to vector<8x1xf32>
    %106 = vector.broadcast %105 : vector<8x1xf32> to vector<8x8xf32>
    %107 = arith.subf %103, %106 : vector<8x8xf32>
    %108 = math.exp %107 : vector<8x8xf32>
    %cst_30 = arith.constant dense<0.000000e+00> : vector<8xf32>
    %109 = vector.multi_reduction <add>, %108, %cst_30 [1] : vector<8x8xf32> to vector<8xf32>
    %110 = vector.shape_cast %109 : vector<8xf32> to vector<8x1xf32>
    %111 = tpu.reciprocal %110 {approx = true} : vector<8x1xf32> -> vector<8x1xf32>
    %112 = vector.broadcast %111 : vector<8x1xf32> to vector<8x8xf32>
    %113 = arith.mulf %108, %112 : vector<8x8xf32>
    %114 = arith.truncf %113 : vector<8x8xf32> to vector<8x8xbf16>
    %cst_31 = arith.constant dense<0.000000e+00> : vector<8x32xf32>
    %115 = tpu.matmul %114, %102, %cst_31 {dimension_numbers = #tpu.dot_dimension_numbers<[1], [0], [0], [1], [0, 0, 1, 1], [], []>} : vector<8x8xbf16>, vector<8x32xbf16>, vector<8x32xf32> -> vector<8x32xf32>
    %116 = tpu.concatenate %55, %75, %95, %115 in 1 : vector<8x32xf32>, vector<8x32xf32>, vector<8x32xf32>, vector<8x32xf32> -> vector<8x128xf32>
    %117 = arith.truncf %116 : vector<8x128xf32> to vector<8x128xbf16>
    %c0_32 = arith.constant 0 : index
    %c0_33 = arith.constant 0 : index
    %118 = vector.load %arg6[%c0_32, %c0_33] : memref<128x128xf32, #tpu.memory_space<vmem>>, vector<128x128xf32>
    %119 = arith.truncf %118 : vector<128x128xf32> to vector<128x128xbf16>
    %cst_34 = arith.constant dense<0.000000e+00> : vector<8x128xf32>
    %120 = tpu.matmul %117, %119, %cst_34 {dimension_numbers = #tpu.dot_dimension_numbers<[1], [0], [0], [1], [0, 0, 1, 1], [], []>} : vector<8x128xbf16>, vector<128x128xbf16>, vector<8x128xf32> -> vector<8x128xf32>
    %c0_35 = arith.constant 0 : index
    %c0_36 = arith.constant 0 : index
    %121 = vector.load %arg7[%c0_35, %c0_36] : memref<1x128xf32, #tpu.memory_space<vmem>>, vector<1x128xf32>
    %122 = vector.broadcast %121 : vector<1x128xf32> to vector<8x128xf32>
    %123 = arith.addf %120, %122 : vector<8x128xf32>
    %c0_37 = arith.constant 0 : index
    %c0_38 = arith.constant 0 : index
    %c0_39 = arith.constant 0 : index
    %124 = vector.load %arg8[%c0_37, %c0_38, %c0_39] : memref<1x8x128xf32, #tpu.memory_space<vmem>>, vector<1x8x128xf32>
    %125 = vector.shape_cast %124 : vector<1x8x128xf32> to vector<8x128xf32>
    %126 = vector.shape_cast %123 : vector<8x128xf32> to vector<1x8x128xf32>
    tpu.vector_store %arg8[%c0_37, %c0_38, %c0_39], %126 {strides = array<i32>} : memref<1x8x128xf32, #tpu.memory_space<vmem>>, vector<1x8x128xf32>,
    return
  }
  func.func @transform_0(%arg0: i32) -> (i32, i32, i32) {
    %c0_i32 = arith.constant 0 : i32
    %c0_i32_0 = arith.constant 0 : i32
    %c0_i32_1 = arith.constant 0 : i32
    return %arg0, %c0_i32, %c0_i32_0 : i32, i32, i32
  }
  func.func @transform_1(%arg0: i32) -> (i32, i32) {
    %c0_i32 = arith.constant 0 : i32
    %c0_i32_0 = arith.constant 0 : i32
    %c0_i32_1 = arith.constant 0 : i32
    return %c0_i32, %c0_i32_0 : i32, i32
  }
  func.func @transform_2(%arg0: i32) -> (i32, i32) {
    %c0_i32 = arith.constant 0 : i32
    %c0_i32_0 = arith.constant 0 : i32
    %c0_i32_1 = arith.constant 0 : i32
    return %c0_i32, %c0_i32_0 : i32, i32
  }
  func.func @transform_3(%arg0: i32) -> (i32, i32) {
    %c0_i32 = arith.constant 0 : i32
    %c0_i32_0 = arith.constant 0 : i32
    %c0_i32_1 = arith.constant 0 : i32
    return %c0_i32, %c0_i32_0 : i32, i32
  }
  func.func @transform_4(%arg0: i32) -> (i32, i32) {
    %c0_i32 = arith.constant 0 : i32
    %c0_i32_0 = arith.constant 0 : i32
    %c0_i32_1 = arith.constant 0 : i32
    return %c0_i32, %c0_i32_0 : i32, i32
  }
  func.func @transform_5(%arg0: i32) -> (i32, i32) {
    %c0_i32 = arith.constant 0 : i32
    %c0_i32_0 = arith.constant 0 : i32
    %c0_i32_1 = arith.constant 0 : i32
    return %c0_i32, %c0_i32_0 : i32, i32
  }
  func.func @transform_6(%arg0: i32) -> (i32, i32) {
    %c0_i32 = arith.constant 0 : i32
    %c0_i32_0 = arith.constant 0 : i32
    %c0_i32_1 = arith.constant 0 : i32
    return %c0_i32, %c0_i32_0 : i32, i32
  }
  func.func @transform_7(%arg0: i32) -> (i32, i32, i32) {
    %c0_i32 = arith.constant 0 : i32
    %c0_i32_0 = arith.constant 0 : i32
    %c0_i32_1 = arith.constant 0 : i32
    return %arg0, %c0_i32, %c0_i32_0 : i32, i32, i32
  }
}

</mosaic_0001>

<llo_original>
// kernel: tpu_custom_call.1
$region0: #{tpu_custom_call.1}
  #allocation0 [shape = 'u32[]', space=smem, size = 0x4, offset = 0x4, fixed_abs, tag = 'smem constant byte address 0x4 - core index']
  #allocation1 [shape = 'u32[72,128]{1,0:T(1,128)}', space=vmem, size = 0x9000, scoped, tag = 'internal scratch']
  %s0 = inlined_call_operand.hbm [shape: f32[2,8,128], index: 0, kind: input, shape index: {}]
  %s1 = inlined_call_operand.hbm [shape: f32[1,128], index: 1, kind: input, shape index: {}]
  %s2 = inlined_call_operand.hbm [shape: f32[1,128], index: 2, kind: input, shape index: {}]
  %s3 = inlined_call_operand.hbm [shape: f32[128,384], index: 3, kind: input, shape index: {}]
  %s4 = inlined_call_operand.vmem [shape: f32[1,384], index: 4, kind: input, shape index: {}]
  %s5 = inlined_call_operand.hbm [shape: f32[128,128], index: 5, kind: input, shape index: {}]
  %s6 = inlined_call_operand.vmem [shape: f32[1,128], index: 6, kind: input, shape index: {}]
  %s7 = inlined_call_operand.hbm [shape: f32[2,8,128], index: 7, kind: output, shape index: {}]
  %s8 = sld [smem:[#allocation0]]
  $region81: #{tpu_custom_call.1} parent=0
    _
  %s10 = ssub.s32 1, %s8
  %s11 = scalar_select 0, %s10, %s8
  $region1: #{tpu_custom_call.1} parent=0
    #allocation2 [shape = 'u8[8192]{0}', space=vmem, size = 0x2000, scoped, tag = 'input window, operand 0']
    #allocation3 [shape = 's32[2]{0}', space=sflag, size = 0x8, scoped, tag = 'scoped memory for tpu_custom_call.1']
    #allocation4 [shape = 's32[2]{0}', space=sflag, size = 0x8, scoped, tag = 'scoped memory for tpu_custom_call.1']
    #allocation5 [shape = 'u8[512]{0}', space=vmem, size = 0x400, scoped, tag = 'input window, operand 1, single buffered']
    #allocation6 [shape = 's32[1]{0}', space=sflag, size = 0x4, scoped, tag = 'scoped memory for tpu_custom_call.1']
    #allocation7 [shape = 'u8[512]{0}', space=vmem, size = 0x400, scoped, tag = 'input window, operand 2, single buffered']
    #allocation8 [shape = 'u8[196608]{0}', space=vmem, size = 0x30000, scoped, tag = 'input window, operand 3, single buffered']
    #allocation9 [shape = 's32[1]{0}', space=sflag, size = 0x4, scoped, tag = 'scoped memory for tpu_custom_call.1']
    #allocation10 [shape = 'u8[65536]{0}', space=vmem, size = 0x10000, scoped, tag = 'input window, operand 5, single buffered']
    #allocation11 [shape = 'u8[8192]{0}', space=vmem, size = 0x2000, scoped, tag = 'output window, operand 0']
    %12 = vsyncpa [#allocation3], 0
    %s13 = scalar_lea.sflag [#allocation3], 1
    %14 = vsyncpa %s13, 0
    %15 = vsyncpa [#allocation6], 0
    %16 = vsyncpa [#allocation9], 0
    %17 = vsyncpa [#allocation4], 0
    %s18 = scalar_lea.sflag [#allocation4], 1
    %19 = vsyncpa %s18, 0
    loop: start=0, step=1, limit=4
    $region2: #{tpu_custom_call.1} parent=1 // loop_pre_header
      _
    $region3: #{tpu_custom_call.1} parent=1 // loop_header
      %s21 = sphi 0, %s25
      %p22 = scmp.ge.s32.totalorder %s21, 4
      %s31 = sphi 0, %s33
      %s34 = sphi 0, %s31
      %s35 = sphi 0, %s34
      %s51 = sphi 0, %s35
      %s55 = sphi 0, %s55
      %s57 = sphi 0, %s55
      %s58 = sphi 0, %s57
      %s72 = sphi 0, %s58
      %s76 = sphi 0, %s76
      %s78 = sphi 0, %s76
      %s79 = sphi 0, %s78
      %s93 = sphi 0, %s79
      %s97 = sphi 0, %s97
      %s99 = sphi 0, %s97
      %s100 = sphi 0, %s99
      %s114 = sphi 0, %s100
      %s118 = sphi 0, %s118
      %s120 = sphi 0, %s118
      %s121 = sphi 0, %s120
      %s135 = sphi 0, %s121
      %s139 = sphi 0, %s139
      %s141 = sphi 0, %s139
      %s142 = sphi 0, %s141
      %s156 = sphi 0, %s142
      %s160 = sphi 0, %s160
      %s162 = sphi 0, %s160
      %s163 = sphi 0, %s162
      %s177 = sphi 0, %s163
      %s183 = sphi 0, %s185
      %s186 = sphi 0, %s183
      %s187 = sphi 0, %s186
      %s203 = sphi 0, %s187
    $region4: #{tpu_custom_call.1} parent=1 // loop_header_branch
      %24 = sbr.rel (%p22) target = $region8
    $region5: #{tpu_custom_call.1} parent=1 // loop_body
      %s26 = ssub.s32 %s21, 1
      %s27 = ssub.s32 %s21, 2
      %s28 = sadd.s32 %s21, 1
      %s29 = ssub.s32 %s21, %s28
      %p30 = scmp.eq.s32.totalorder %s29, 0
      %s32 = sadd.s32 %s31, 1
      %s33 = scalar_select %p30, %s31, %s32
      %p36 = pneg %p30
      %p37 = scmp.eq.s32.totalorder %s21, 1
      %p38 = por %p36, %p37
      %p39 = scmp.ne.s32.totalorder %s31, %s34
      %p40 = scmp.eq.s32.totalorder %s21, 0
      %p41 = por %p39, %p40
      %p42 = scmp.ne.s32.totalorder %s31, %s34
      %p43 = scmp.eq.s32.totalorder %s26, 1
      %p44 = por %p42, %p43
      %p45 = scmp.ne.s32.totalorder %s34, %s35
      %p46 = scmp.eq.s32.totalorder %s26, 0
      %p47 = por %p45, %p46
      %p48 = scmp.ne.s32.totalorder %s34, %s35
      %p49 = scmp.eq.s32.totalorder %s27, 1
      %p50 = por %p48, %p49
      %p52 = scmp.ne.s32.totalorder %s35, %s51
      %p53 = scmp.eq.s32.totalorder %s27, 0
      %p54 = por %p52, %p53
      %s56 = sadd.s32 %s55, 1
      %p59 = scmp.eq.s32.totalorder %s21, 1
      %p60 = scmp.ne.s32.totalorder %s55, %s57
      %p61 = scmp.eq.s32.totalorder %s21, 0
      %p62 = por %p60, %p61
      %p63 = scmp.ne.s32.totalorder %s55, %s57
      %p64 = scmp.eq.s32.totalorder %s26, 1
      %p65 = por %p63, %p64
      %p66 = scmp.ne.s32.totalorder %s57, %s58
      %p67 = scmp.eq.s32.totalorder %s26, 0
      %p68 = por %p66, %p67
      %p69 = scmp.ne.s32.totalorder %s57, %s58
      %p70 = scmp.eq.s32.totalorder %s27, 1
      %p71 = por %p69, %p70
      %p73 = scmp.ne.s32.totalorder %s58, %s72
      %p74 = scmp.eq.s32.totalorder %s27, 0
      %p75 = por %p73, %p74
      %s77 = sadd.s32 %s76, 1
      %p80 = scmp.eq.s32.totalorder %s21, 1
      %p81 = scmp.ne.s32.totalorder %s76, %s78
      %p82 = scmp.eq.s32.totalorder %s21, 0
      %p83 = por %p81, %p82
      %p84 = scmp.ne.s32.totalorder %s76, %s78
      %p85 = scmp.eq.s32.totalorder %s26, 1
      %p86 = por %p84, %p85
      %p87 = scmp.ne.s32.totalorder %s78, %s79
      %p88 = scmp.eq.s32.totalorder %s26, 0
      %p89 = por %p87, %p88
      %p90 = scmp.ne.s32.totalorder %s78, %s79
      %p91 = scmp.eq.s32.totalorder %s27, 1
      %p92 = por %p90, %p91
      %p94 = scmp.ne.s32.totalorder %s79, %s93
      %p95 = scmp.eq.s32.totalorder %s27, 0
      %p96 = por %p94, %p95
      %s98 = sadd.s32 %s97, 1
      %p101 = scmp.eq.s32.totalorder %s21, 1
      %p102 = scmp.ne.s32.totalorder %s97, %s99
      %p103 = scmp.eq.s32.totalorder %s21, 0
      %p104 = por %p102, %p103
      %p105 = scmp.ne.s32.totalorder %s97, %s99
      %p106 = scmp.eq.s32.totalorder %s26, 1
      %p107 = por %p105, %p106
      %p108 = scmp.ne.s32.totalorder %s99, %s100
      %p109 = scmp.eq.s32.totalorder %s26, 0
      %p110 = por %p108, %p109
      %p111 = scmp.ne.s32.totalorder %s99, %s100
      %p112 = scmp.eq.s32.totalorder %s27, 1
      %p113 = por %p111, %p112
      %p115 = scmp.ne.s32.totalorder %s100, %s114
      %p116 = scmp.eq.s32.totalorder %s27, 0
      %p117 = por %p115, %p116
      %s119 = sadd.s32 %s118, 1
      %p122 = scmp.eq.s32.totalorder %s21, 1
      %p123 = scmp.ne.s32.totalorder %s118, %s120
      %p124 = scmp.eq.s32.totalorder %s21, 0
      %p125 = por %p123, %p124
      %p126 = scmp.ne.s32.totalorder %s118, %s120
      %p127 = scmp.eq.s32.totalorder %s26, 1
      %p128 = por %p126, %p127
      %p129 = scmp.ne.s32.totalorder %s120, %s121
      %p130 = scmp.eq.s32.totalorder %s26, 0
      %p131 = por %p129, %p130
      %p132 = scmp.ne.s32.totalorder %s120, %s121
      %p133 = scmp.eq.s32.totalorder %s27, 1
      %p134 = por %p132, %p133
      %p136 = scmp.ne.s32.totalorder %s121, %s135
      %p137 = scmp.eq.s32.totalorder %s27, 0
      %p138 = por %p136, %p137
      %s140 = sadd.s32 %s139, 1
      %p143 = scmp.eq.s32.totalorder %s21, 1
      %p144 = scmp.ne.s32.totalorder %s139, %s141
      %p145 = scmp.eq.s32.totalorder %s21, 0
      %p146 = por %p144, %p145
      %p147 = scmp.ne.s32.totalorder %s139, %s141
      %p148 = scmp.eq.s32.totalorder %s26, 1
      %p149 = por %p147, %p148
      %p150 = scmp.ne.s32.totalorder %s141, %s142
      %p151 = scmp.eq.s32.totalorder %s26, 0
      %p152 = por %p150, %p151
      %p153 = scmp.ne.s32.totalorder %s141, %s142
      %p154 = scmp.eq.s32.totalorder %s27, 1
      %p155 = por %p153, %p154
      %p157 = scmp.ne.s32.totalorder %s142, %s156
      %p158 = scmp.eq.s32.totalorder %s27, 0
      %p159 = por %p157, %p158
      %s161 = sadd.s32 %s160, 1
      %p164 = scmp.eq.s32.totalorder %s21, 1
      %p165 = scmp.ne.s32.totalorder %s160, %s162
      %p166 = scmp.eq.s32.totalorder %s21, 0
      %p167 = por %p165, %p166
      %p168 = scmp.ne.s32.totalorder %s160, %s162
      %p169 = scmp.eq.s32.totalorder %s26, 1
      %p170 = por %p168, %p169
      %p171 = scmp.ne.s32.totalorder %s162, %s163
      %p172 = scmp.eq.s32.totalorder %s26, 0
      %p173 = por %p171, %p172
      %p174 = scmp.ne.s32.totalorder %s162, %s163
      %p175 = scmp.eq.s32.totalorder %s27, 1
      %p176 = por %p174, %p175
      %p178 = scmp.ne.s32.totalorder %s163, %s177
      %p179 = scmp.eq.s32.totalorder %s27, 0
      %p180 = por %p178, %p179
      %s181 = ssub.s32 %s21, %s28
      %p182 = scmp.eq.s32.totalorder %s181, 0
      %s184 = sadd.s32 %s183, 1
      %s185 = scalar_select %p182, %s183, %s184
      %p188 = pneg %p182
      %p189 = scmp.eq.s32.totalorder %s21, 1
      %p190 = por %p188, %p189
      %p191 = scmp.ne.s32.totalorder %s183, %s186
      %p192 = scmp.eq.s32.totalorder %s21, 0
      %p193 = por %p191, %p192
      %p194 = scmp.ne.s32.totalorder %s183, %s186
      %p195 = scmp.eq.s32.totalorder %s26, 1
      %p196 = por %p194, %p195
      %p197 = scmp.ne.s32.totalorder %s186, %s187
      %p198 = scmp.eq.s32.totalorder %s26, 0
      %p199 = por %p197, %p198
      %p200 = scmp.ne.s32.totalorder %s186, %s187
      %p201 = scmp.eq.s32.totalorder %s27, 1
      %p202 = por %p200, %p201
      %p204 = scmp.ne.s32.totalorder %s187, %s203
      %p205 = scmp.eq.s32.totalorder %s27, 0
      %p206 = por %p204, %p205
      %p207 = scmp.le.s32.totalorder 1, %s21
      %p208 = scmp.lt.s32.totalorder %s21, 3
      %p209 = pnand %p207, %p208
      %p210 = pneg %p209
      // Predicated region
      $region9: #{tpu_custom_call.1} parent=5 // pred_check
        _
      $region10: #{tpu_custom_call.1} parent=5 // pred_check_branch
        %212 = sbr.rel (%p209) target = $region12
      $region11: #{tpu_custom_call.1} parent=5 // pred_region
        %s213 = ssub.s32 %s21, 1
        // Predicated region
        $region13: #{tpu_custom_call.1} parent=11 // pred_check
          %p214 = pneg %p68
        $region14: #{tpu_custom_call.1} parent=11 // pred_check_branch
          %216 = sbr.rel (%p214) target = $region16
        $region15: #{tpu_custom_call.1} parent=11 // pred_region
          %218 = vsyncadd [#allocation6], 0
          %s220 = sshll.u32 %s1, 4
          %s221 = int_to_ptr.hbm [resolvable:$true] %s220
          %s222 = sshll.u32 [#allocation5], 4
          %s223 = int_to_ptr.vmem [resolvable:$true] %s222
          %225 = dma.hbm_to_vmem [thread:$0]  %s221, 16, %s223, [#allocation6]
        $region16: #{tpu_custom_call.1} parent=11 // pred_fallthru
          _
        // Predicated region
        $region17: #{tpu_custom_call.1} parent=11 // pred_check
          %p226 = pneg %p89
        $region18: #{tpu_custom_call.1} parent=11 // pred_check_branch
          %228 = sbr.rel (%p226) target = $region20
        $region19: #{tpu_custom_call.1} parent=11 // pred_region
          %230 = vsyncadd [#allocation6], 0
          %s232 = sshll.u32 %s2, 4
          %s233 = int_to_ptr.hbm [resolvable:$true] %s232
          %s234 = sshll.u32 [#allocation7], 4
          %s235 = int_to_ptr.vmem [resolvable:$true] %s234
          %237 = dma.hbm_to_vmem [thread:$0]  %s233, 16, %s235, [#allocation6]
        $region20: #{tpu_custom_call.1} parent=11 // pred_fallthru
          _
        // Predicated region
        $region21: #{tpu_custom_call.1} parent=11 // pred_check
          %p238 = pneg %p110
        $region22: #{tpu_custom_call.1} parent=11 // pred_check_branch
          %240 = sbr.rel (%p238) target = $region24
        $region23: #{tpu_custom_call.1} parent=11 // pred_region
          %242 = vsyncadd [#allocation9], 0
          %s243 = sshll.u32 %s3, 4
          %s244 = int_to_ptr.hbm [resolvable:$true] %s243
          %s245 = sshll.u32 [#allocation8], 4
          %s246 = int_to_ptr.vmem [resolvable:$true] %s245
          %251 = dma.hbm_to_vmem [thread:$0]  %s244, 6144, %s246, [#allocation9], 384, 384, 24
        $region24: #{tpu_custom_call.1} parent=11 // pred_fallthru
          _
        // Predicated region
        $region25: #{tpu_custom_call.1} parent=11 // pred_check
          %p252 = pneg %p131
        $region26: #{tpu_custom_call.1} parent=11 // pred_check_branch
          %254 = sbr.rel (%p252) target = $region28
        $region27: #{tpu_custom_call.1} parent=11 // pred_region
          _
        $region28: #{tpu_custom_call.1} parent=11 // pred_fallthru
          _
        // Predicated region
        $region29: #{tpu_custom_call.1} parent=11 // pred_check
          %p255 = pneg %p152
        $region30: #{tpu_custom_call.1} parent=11 // pred_check_branch
          %257 = sbr.rel (%p255) target = $region32
        $region31: #{tpu_custom_call.1} parent=11 // pred_region
          %259 = vsyncadd [#allocation9], 0
          %s260 = sshll.u32 %s5, 4
          %s261 = int_to_ptr.hbm [resolvable:$true] %s260
          %s262 = sshll.u32 [#allocation10], 4
          %s263 = int_to_ptr.vmem [resolvable:$true] %s262
          %268 = dma.hbm_to_vmem [thread:$0]  %s261, 2048, %s263, [#allocation9], 128, 128, 8
        $region32: #{tpu_custom_call.1} parent=11 // pred_fallthru
          _
        // Predicated region
        $region33: #{tpu_custom_call.1} parent=11 // pred_check
          %p269 = pneg %p173
        $region34: #{tpu_custom_call.1} parent=11 // pred_check_branch
          %271 = sbr.rel (%p269) target = $region36
        $region35: #{tpu_custom_call.1} parent=11 // pred_region
          _
        $region36: #{tpu_custom_call.1} parent=11 // pred_fallthru
          _
      $region12: #{tpu_custom_call.1} parent=5 // pred_fallthru
        _
      %p272 = scmp.lt.s32.totalorder %s21, 2
      // Predicated region
      $region37: #{tpu_custom_call.1} parent=5 // pred_check
        %p273 = pneg %p272
      $region38: #{tpu_custom_call.1} parent=5 // pred_check_branch
        %275 = sbr.rel (%p273) target = $region40
      $region39: #{tpu_custom_call.1} parent=5 // pred_region
        // Predicated region
        $region41: #{tpu_custom_call.1} parent=39 // pred_check
          %p276 = pneg %p41
        $region42: #{tpu_custom_call.1} parent=39 // pred_check_branch
          %278 = sbr.rel (%p276) target = $region44
        $region43: #{tpu_custom_call.1} parent=39 // pred_region
          %s279 = sand.u32 %s31, 1
          %s280 = scalar_lea.sflag [#allocation3], %s279
          %s281 = sand.u32 %s31, 1
          %s282 = smul.addr %s281, 8
          %s283 = scalar_lea.vmem [#allocation2], %s282
          %285 = vsyncadd %s280, 0
          %s286 = smul.addr %s21, 8
          %s287 = scalar_lea.hbm %s0, %s286
          %s289 = sshll.u32 %s287, 4
          %s290 = int_to_ptr.hbm [resolvable:$true] %s289
          %s291 = sshll.u32 %s283, 4
          %s292 = int_to_ptr.vmem [resolvable:$true] %s291
          %294 = dma.hbm_to_vmem [thread:$0]  %s290, 128, %s292, %s280
        $region44: #{tpu_custom_call.1} parent=39 // pred_fallthru
          _
      $region40: #{tpu_custom_call.1} parent=5 // pred_fallthru
        _
      %p295 = scmp.le.s32.totalorder 1, %s21
      %p296 = scmp.lt.s32.totalorder %s21, 3
      %p297 = pnand %p295, %p296
      %p298 = pneg %p297
      // Predicated region
      $region45: #{tpu_custom_call.1} parent=5 // pred_check
        _
      $region46: #{tpu_custom_call.1} parent=5 // pred_check_branch
        %300 = sbr.rel (%p297) target = $region48
      $region47: #{tpu_custom_call.1} parent=5 // pred_region
        %s301 = ssub.s32 %s21, 1
        %s302 = sand.u32 %s34, 1
        %s303 = scalar_lea.sflag [#allocation3], %s302
        %s304 = sand.u32 %s34, 1
        %s305 = smul.addr %s304, 8
        %s306 = scalar_lea.vmem [#allocation2], %s305
        // Predicated region
        $region49: #{tpu_custom_call.1} parent=47 // pred_check
          %p307 = pneg %p47
        $region50: #{tpu_custom_call.1} parent=47 // pred_check_branch
          %309 = sbr.rel (%p307) target = $region52
        $region51: #{tpu_custom_call.1} parent=47 // pred_region
          %311 = dma.done %s303, 128
        $region52: #{tpu_custom_call.1} parent=47 // pred_fallthru
          _
        // Predicated region
        $region53: #{tpu_custom_call.1} parent=47 // pred_check
          %p312 = pneg %p68
        $region54: #{tpu_custom_call.1} parent=47 // pred_check_branch
          %314 = sbr.rel (%p312) target = $region56
        $region55: #{tpu_custom_call.1} parent=47 // pred_region
          %316 = dma.done [#allocation6], 16
        $region56: #{tpu_custom_call.1} parent=47 // pred_fallthru
          _
        // Predicated region
        $region57: #{tpu_custom_call.1} parent=47 // pred_check
          %p317 = pneg %p89
        $region58: #{tpu_custom_call.1} parent=47 // pred_check_branch
          %319 = sbr.rel (%p317) target = $region60
        $region59: #{tpu_custom_call.1} parent=47 // pred_region
          %321 = dma.done [#allocation6], 16
        $region60: #{tpu_custom_call.1} parent=47 // pred_fallthru
          _
        // Predicated region
        $region61: #{tpu_custom_call.1} parent=47 // pred_check
          %p322 = pneg %p110
        $region62: #{tpu_custom_call.1} parent=47 // pred_check_branch
          %324 = sbr.rel (%p322) target = $region64
        $region63: #{tpu_custom_call.1} parent=47 // pred_region
          %326 = dma.done [#allocation9], 6144
        $region64: #{tpu_custom_call.1} parent=47 // pred_fallthru
          _
        // Predicated region
        $region65: #{tpu_custom_call.1} parent=47 // pred_check
          %p327 = pneg %p152
        $region66: #{tpu_custom_call.1} parent=47 // pred_check_branch
          %329 = sbr.rel (%p327) target = $region68
        $region67: #{tpu_custom_call.1} parent=47 // pred_region
          %331 = dma.done [#allocation9], 2048
        $region68: #{tpu_custom_call.1} parent=47 // pred_fallthru
          _
        %s332 = sand.u32 %s34, 1
        %s333 = scalar_lea.sflag [#allocation3], %s332
        %s334 = sand.u32 %s34, 1
        %s335 = smul.addr %s334, 8
        %s336 = scalar_lea.vmem [#allocation2], %s335
        %p337 = pneg %p47
        %p338 = pneg %p44
        %p339 = pneg %p68
        %p340 = pneg %p65
        %p341 = pneg %p89
        %p342 = pneg %p86
        %p343 = pneg %p110
        %p344 = pneg %p107
        %p345 = pneg %p131
        %p346 = pneg %p128
        %p347 = pneg %p152
        %p348 = pneg %p149
        %p349 = pneg %p173
        %p350 = pneg %p170
        %p351 = pneg %p199
        %p352 = pneg %p196
        %s353 = sand.u32 %s186, 1
        %s354 = scalar_lea.sflag [#allocation4], %s353
        %s355 = sand.u32 %s186, 1
        %s356 = smul.addr %s355, 8
        %s357 = scalar_lea.vmem [#allocation11], %s356
        %v359 = vld [vmem:[%s306] sm:$0xff]
        %360 = vadd.xlane.f32.xlu0 %v359
        %v361 = vpop.xlane.xlu0 %360
        %v362 = vrcp.pop 128.0
        %v363 = vmul.f32 128.0, %v362
        %v364 = vsub.f32 1.0, %v363
        %v365 = vmul.f32 %v362, %v364
        %v366 = vadd.f32 %v362, %v365
        %vm367 = vweird.f32 %v362
        %v368 = vsel %vm367, %v362, %v366
        %v369 = vmul.f32 %v361, %v368
        %v370 = vsub.f32 %v359, %v369
        %v371 = vmul.f32 %v370, %v370
        %372 = vadd.xlane.f32.xlu0 %v371
        %v373 = vpop.xlane.xlu0 %372
        %v374 = vmul.f32 %v373, %v368
        %v375 = vadd.f32 %v374, 1e-06
        %v376 = vrsqrt.pop %v375
        %v377 = vmul.f32 %v376, %v375
        %v378 = vmul.f32 %v377, %v376
        %v379 = vmul.f32 0.5, %v378
        %v380 = vsub.f32 1.5, %v379
        %v381 = vmul.f32 %v376, %v380
        %vm382 = vweird.f32 %v375
        %vm383 = vweird.f32 %v376
        %vm384 = vmor %vm382, %vm383
        %v385 = vsel %vm384, %v376, %v381
        %v386 = vmul.f32 %v370, %v385
        %v387 = vld [vmem:[#allocation5] sm:$0x1]
        %v389 = vperm.slane %v387, 0
        %v391 = vmul.f32 %v386, %v389
        %v392 = vld [vmem:[#allocation7] sm:$0x1]
        %v394 = vperm.slane %v392, 0
        %v396 = vadd.f32 %v391, %v394
        %v397 = vpack.c.bf16 %v396, %v396
        %v398 = vld [vmem:[#allocation8] sm:$0xff]
        %v399 = vld [vmem:[#allocation8 + $0x8] sm:$0xff]
        %v400 = vld [vmem:[#allocation8 + $0x10] sm:$0xff]
        %v401 = vld [vmem:[#allocation8 + $0x18] sm:$0xff]
        %v402 = vld [vmem:[#allocation8 + $0x20] sm:$0xff]
        %v403 = vld [vmem:[#allocation8 + $0x28] sm:$0xff]
        %v404 = vld [vmem:[#allocation8 + $0x30] sm:$0xff]
        %v405 = vld [vmem:[#allocation8 + $0x38] sm:$0xff]
        %v406 = vld [vmem:[#allocation8 + $0x40] sm:$0xff]
        %v407 = vld [vmem:[#allocation8 + $0x48] sm:$0xff]
        %v408 = vld [vmem:[#allocation8 + $0x50] sm:$0xff]
        %v409 = vld [vmem:[#allocation8 + $0x58] sm:$0xff]
        %v410 = vld [vmem:[#allocation8 + $0x60] sm:$0xff]
        %v411 = vld [vmem:[#allocation8 + $0x68] sm:$0xff]
        %v412 = vld [vmem:[#allocation8 + $0x70] sm:$0xff]
        %v413 = vld [vmem:[#allocation8 + $0x78] sm:$0xff]
        %v414 = vld [vmem:[#allocation8 + $0x80] sm:$0xff]
        %v415 = vld [vmem:[#allocation8 + $0x88] sm:$0xff]
        %v416 = vld [vmem:[#allocation8 + $0x90] sm:$0xff]
        %v417 = vld [vmem:[#allocation8 + $0x98] sm:$0xff]
        %v418 = vld [vmem:[#allocation8 + $0xa0] sm:$0xff]
        %v419 = vld [vmem:[#allocation8 + $0xa8] sm:$0xff]
        %v420 = vld [vmem:[#allocation8 + $0xb0] sm:$0xff]
        %v421 = vld [vmem:[#allocation8 + $0xb8] sm:$0xff]
        %v422 = vld [vmem:[#allocation8 + $0xc0] sm:$0xff]
        %v423 = vld [vmem:[#allocation8 + $0xc8] sm:$0xff]
        %v424 = vld [vmem:[#allocation8 + $0xd0] sm:$0xff]
        %v425 = vld [vmem:[#allocation8 + $0xd8] sm:$0xff]
        %v426 = vld [vmem:[#allocation8 + $0xe0] sm:$0xff]
        %v427 = vld [vmem:[#allocation8 + $0xe8] sm:$0xff]
        %v428 = vld [vmem:[#allocation8 + $0xf0] sm:$0xff]
        %v429 = vld [vmem:[#allocation8 + $0xf8] sm:$0xff]
        %v430 = vld [vmem:[#allocation8 + $0x100] sm:$0xff]
        %v431 = vld [vmem:[#allocation8 + $0x108] sm:$0xff]
        %v432 = vld [vmem:[#allocation8 + $0x110] sm:$0xff]
        %v433 = vld [vmem:[#allocation8 + $0x118] sm:$0xff]
        %v434 = vld [vmem:[#allocation8 + $0x120] sm:$0xff]
        %v435 = vld [vmem:[#allocation8 + $0x128] sm:$0xff]
        %v436 = vld [vmem:[#allocation8 + $0x130] sm:$0xff]
        %v437 = vld [vmem:[#allocation8 + $0x138] sm:$0xff]
        %v438 = vld [vmem:[#allocation8 + $0x140] sm:$0xff]
        %v439 = vld [vmem:[#allocation8 + $0x148] sm:$0xff]
        %v440 = vld [vmem:[#allocation8 + $0x150] sm:$0xff]
        %v441 = vld [vmem:[#allocation8 + $0x158] sm:$0xff]
        %v442 = vld [vmem:[#allocation8 + $0x160] sm:$0xff]
        %v443 = vld [vmem:[#allocation8 + $0x168] sm:$0xff]
        %v444 = vld [vmem:[#allocation8 + $0x170] sm:$0xff]
        %v445 = vld [vmem:[#allocation8 + $0x178] sm:$0xff]
        %v446 = vpack.c.bf16 %v401, %v398
        %v447 = vpack.c.bf16 %v402, %v399
        %v448 = vpack.c.bf16 %v403, %v400
        %v449 = vpack.c.bf16 %v407, %v404
        %v450 = vpack.c.bf16 %v408, %v405
        %v451 = vpack.c.bf16 %v409, %v406
        %v452 = vpack.c.bf16 %v413, %v410
        %v453 = vpack.c.bf16 %v414, %v411
        %v454 = vpack.c.bf16 %v415, %v412
        %v455 = vpack.c.bf16 %v419, %v416
        %v456 = vpack.c.bf16 %v420, %v417
        %v457 = vpack.c.bf16 %v421, %v418
        %v458 = vpack.c.bf16 %v425, %v422
        %v459 = vpack.c.bf16 %v426, %v423
        %v460 = vpack.c.bf16 %v427, %v424
        %v461 = vpack.c.bf16 %v431, %v428
        %v462 = vpack.c.bf16 %v432, %v429
        %v463 = vpack.c.bf16 %v433, %v430
        %v464 = vpack.c.bf16 %v437, %v434
        %v465 = vpack.c.bf16 %v438, %v435
        %v466 = vpack.c.bf16 %v439, %v436
        %v467 = vpack.c.bf16 %v443, %v440
        %v468 = vpack.c.bf16 %v444, %v441
        %v469 = vpack.c.bf16 %v445, %v442
        %v470 = vld [vmem:[%s4] sm:$0x7]
        %v472 = vperm.slane %v470, 0
        %v473 = vperm.slane %v470, 1
        %v474 = vperm.slane %v470, 2
        %478 = vmatpush.bf16.msra.mxu0 %v467
        %479 = vmatpush.bf16.msra.mxu0 %v464
        %480 = vmatpush.bf16.msra.mxu0 %v461
        %481 = vmatpush.bf16.msra.mxu0 %v458
        %482 = vmatpush.bf16.msra.mxu0 %v455
        %483 = vmatpush.bf16.msra.mxu0 %v452
        %484 = vmatpush.bf16.msra.mxu0 %v449
        %485 = vmatpush.bf16.msra.mxu0 %v446
        %486 = vmatmul.bf16.gmra.mxu0 %v397
        %v487 = vpop.f32.mrf.mxu0
        %v488 = vadd.f32 %v472, %v487
        %v489 = vpop.f32.mrf.mxu0
        %490 = vdwg.mxu0
        %491 = vmatpush.bf16.msra.mxu0 %v468
        %492 = vmatpush.bf16.msra.mxu0 %v465
        %493 = vmatpush.bf16.msra.mxu0 %v462
        %494 = vmatpush.bf16.msra.mxu0 %v459
        %495 = vmatpush.bf16.msra.mxu0 %v456
        %496 = vmatpush.bf16.msra.mxu0 %v453
        %497 = vmatpush.bf16.msra.mxu0 %v450
        %498 = vmatpush.bf16.msra.mxu0 %v447
        %499 = vmatmul.bf16.gmra.mxu0 %v397
        %v500 = vpop.f32.mrf.mxu0
        %v501 = vadd.f32 %v473, %v500
        %v502 = vpop.f32.mrf.mxu0
        %503 = vdwg.mxu0
        %504 = vmatpush.bf16.msra.mxu0 %v469
        %505 = vmatpush.bf16.msra.mxu0 %v466
        %506 = vmatpush.bf16.msra.mxu0 %v463
        %507 = vmatpush.bf16.msra.mxu0 %v460
        %508 = vmatpush.bf16.msra.mxu0 %v457
        %509 = vmatpush.bf16.msra.mxu0 %v454
        %510 = vmatpush.bf16.msra.mxu0 %v451
        %511 = vmatpush.bf16.msra.mxu0 %v448
        %512 = vmatmul.bf16.gmra.mxu0 %v397
        %v513 = vpop.f32.mrf.mxu0
        %v514 = vadd.f32 %v474, %v513
        %v515 = vpop.f32.mrf.mxu0
        %516 = vdwg.mxu0
        %v517 = vmul.f32 %v488, 0.17677669
        %v518 = vpack.c.bf16 %v517, %v517
        %519 = vxpose.xlu0.b32.start [1/16] %v501, 128
        %520 = vxpose.xlu0.b32.cont [2/16] 0.0, 128
        %521 = vxpose.xlu0.b32.cont [3/16] 0.0, 128
        %522 = vxpose.xlu0.b32.cont [4/16] 0.0, 128
        %523 = vxpose.xlu0.b32.cont [5/16] 0.0, 128
        %524 = vxpose.xlu0.b32.cont [6/16] 0.0, 128
        %525 = vxpose.xlu0.b32.cont [7/16] 0.0, 128
        %526 = vxpose.xlu0.b32.cont [8/16] 0.0, 128
        %527 = vxpose.xlu0.b32.cont [9/16] 0.0, 128
        %528 = vxpose.xlu0.b32.cont [10/16] 0.0, 128
        %529 = vxpose.xlu0.b32.cont [11/16] 0.0, 128
        %530 = vxpose.xlu0.b32.cont [12/16] 0.0, 128
        %531 = vxpose.xlu0.b32.cont [13/16] 0.0, 128
        %532 = vxpose.xlu0.b32.cont [14/16] 0.0, 128
        %533 = vxpose.xlu0.b32.cont [15/16] 0.0, 128
        %534 = vxpose.xlu0.b32.end [16/16] 0.0, 128
        %v535 = vpop.trf.xlu0
        %v536 = vpop.trf.xlu0
        %v537 = vpop.trf.xlu0
        %v538 = vpop.trf.xlu0
        %v539 = vpop.trf.xlu0
        %v540 = vpop.trf.xlu0
        %v541 = vpop.trf.xlu0
        %v542 = vpop.trf.xlu0
        %v543 = vpop.trf.xlu0
        %v544 = vpop.trf.xlu0
        %v545 = vpop.trf.xlu0
        %v546 = vpop.trf.xlu0
        %v547 = vpop.trf.xlu0
        %v548 = vpop.trf.xlu0
        %v549 = vpop.trf.xlu0
        %v550 = vpop.trf.xlu0
        %v551 = vpack.c.bf16 %v536, %v535
        %v552 = vpack.c.bf16 %v538, %v537
        %v553 = vpack.c.bf16 %v514, %v514
        %vm554 = vcmask 261120
        %v556 = vsel %vm554, %v518, 0
        %558 = vmatpush.bf16.msra.mxu0 0
        %559 = vmatpush.bf16.msra.mxu0 0
        %560 = vmatpush.bf16.msra.mxu0 0
        %561 = vmatpush.bf16.msra.mxu0 0
        %562 = vmatpush.bf16.msra.mxu0 0
        %563 = vmatpush.bf16.msra.mxu0 0
        %564 = vmatpush.bf16.msra.mxu0 %v552
        %565 = vmatpush.bf16.msra.mxu0 %v551
        %566 = vmatmul.bf16.gmra.mxu0 %v556
        %v567 = vpop.f32.mrf.mxu0
        %v568 = vadd.f32 0.0, %v567
        %v569 = vpop.f32.mrf.mxu0
        %570 = vdwg.mxu0
        %vm571 = vcmask 64512
        %v572 = vsel %vm571, %v568, -inf
        %573 = vmax.xlane.f32.xlu0 %v572
        %v574 = vpop.xlane.xlu0 %573
        %v575 = vsub.f32 %v568, %v574
        %v576 = vmul.f32 %v575, 1.442695
        %v577 = vpow.pop %v576
        %v578 = vsel %vm571, %v577, 0.0
        %579 = vadd.xlane.f32.xlu0 %v578
        %v580 = vpop.xlane.xlu0 %579
        %v581 = vrcp.pop %v580
        %v582 = vmul.f32 %v577, %v581
        %v583 = vpack.c.bf16 %v582, %v582
        %v585 = vsel %vm571, %v583, 0
        %vm587 = vcmask 1043456
        %v589 = vsel %vm587, %v553, 0
        %591 = vmatpush.bf16.msra.mxu0 0
        %592 = vmatpush.bf16.msra.mxu0 0
        %593 = vmatpush.bf16.msra.mxu0 0
        %594 = vmatpush.bf16.msra.mxu0 0
        %595 = vmatpush.bf16.msra.mxu0 0
        %596 = vmatpush.bf16.msra.mxu0 0
        %597 = vmatpush.bf16.msra.mxu0 0
        %598 = vmatpush.bf16.msra.mxu0 %v589
        %599 = vmatmul.bf16.gmra.mxu0 %v585
        %v600 = vpop.f32.mrf.mxu0
        %v601 = vadd.f32 0.0, %v600
        %v602 = vpop.f32.mrf.mxu0
        %603 = vdwg.mxu0
        %605 = vrot.lane.b32.xlu0 %v501, 96
        %v606 = vpop.permute.xlu0 %605
        %608 = vxpose.xlu0.b32.start [1/16] %v606, 128
        %609 = vxpose.xlu0.b32.cont [2/16] 0.0, 128
        %610 = vxpose.xlu0.b32.cont [3/16] 0.0, 128
        %611 = vxpose.xlu0.b32.cont [4/16] 0.0, 128
        %612 = vxpose.xlu0.b32.cont [5/16] 0.0, 128
        %613 = vxpose.xlu0.b32.cont [6/16] 0.0, 128
        %614 = vxpose.xlu0.b32.cont [7/16] 0.0, 128
        %615 = vxpose.xlu0.b32.cont [8/16] 0.0, 128
        %616 = vxpose.xlu0.b32.cont [9/16] 0.0, 128
        %617 = vxpose.xlu0.b32.cont [10/16] 0.0, 128
        %618 = vxpose.xlu0.b32.cont [11/16] 0.0, 128
        %619 = vxpose.xlu0.b32.cont [12/16] 0.0, 128
        %620 = vxpose.xlu0.b32.cont [13/16] 0.0, 128
        %621 = vxpose.xlu0.b32.cont [14/16] 0.0, 128
        %622 = vxpose.xlu0.b32.cont [15/16] 0.0, 128
        %623 = vxpose.xlu0.b32.end [16/16] 0.0, 128
        %v624 = vpop.trf.xlu0
        %v625 = vpop.trf.xlu0
        %v626 = vpop.trf.xlu0
        %v627 = vpop.trf.xlu0
        %v628 = vpop.trf.xlu0
        %v629 = vpop.trf.xlu0
        %v630 = vpop.trf.xlu0
        %v631 = vpop.trf.xlu0
        %v632 = vpop.trf.xlu0
        %v633 = vpop.trf.xlu0
        %v634 = vpop.trf.xlu0
        %v635 = vpop.trf.xlu0
        %v636 = vpop.trf.xlu0
        %v637 = vpop.trf.xlu0
        %v638 = vpop.trf.xlu0
        %v639 = vpop.trf.xlu0
        %v640 = vpack.c.bf16 %v625, %v624
        %v641 = vpack.c.bf16 %v627, %v626
        %643 = vrot.lane.b32.xlu0 %v518, 96
        %v644 = vpop.permute.xlu0 %643
        %v646 = vsel %vm554, %v644, 0
        %648 = vmatpush.bf16.msra.mxu0 0
        %649 = vmatpush.bf16.msra.mxu0 0
        %650 = vmatpush.bf16.msra.mxu0 0
        %651 = vmatpush.bf16.msra.mxu0 0
        %652 = vmatpush.bf16.msra.mxu0 0
        %653 = vmatpush.bf16.msra.mxu0 0
        %654 = vmatpush.bf16.msra.mxu0 %v641
        %655 = vmatpush.bf16.msra.mxu0 %v640
        %656 = vmatmul.bf16.gmra.mxu0 %v646
        %v657 = vpop.f32.mrf.mxu0
        %v658 = vadd.f32 0.0, %v657
        %v659 = vpop.f32.mrf.mxu0
        %660 = vdwg.mxu0
        %v661 = vsel %vm571, %v658, -inf
        %662 = vmax.xlane.f32.xlu0 %v661
        %v663 = vpop.xlane.xlu0 %662
        %v664 = vsub.f32 %v658, %v663
        %v665 = vmul.f32 %v664, 1.442695
        %v666 = vpow.pop %v665
        %v667 = vsel %vm571, %v666, 0.0
        %668 = vadd.xlane.f32.xlu0 %v667
        %v669 = vpop.xlane.xlu0 %668
        %v670 = vrcp.pop %v669
        %v671 = vmul.f32 %v666, %v670
        %v672 = vpack.c.bf16 %v671, %v671
        %674 = vrot.lane.b32.xlu0 %v553, 96
        %v675 = vpop.permute.xlu0 %674
        %v677 = vsel %vm571, %v672, 0
        %v680 = vsel %vm587, %v675, 0
        %682 = vmatpush.bf16.msra.mxu0 0
        %683 = vmatpush.bf16.msra.mxu0 0
        %684 = vmatpush.bf16.msra.mxu0 0
        %685 = vmatpush.bf16.msra.mxu0 0
        %686 = vmatpush.bf16.msra.mxu0 0
        %687 = vmatpush.bf16.msra.mxu0 0
        %688 = vmatpush.bf16.msra.mxu0 0
        %689 = vmatpush.bf16.msra.mxu0 %v680
        %690 = vmatmul.bf16.gmra.mxu0 %v677
        %v691 = vpop.f32.mrf.mxu0
        %v692 = vadd.f32 0.0, %v691
        %v693 = vpop.f32.mrf.mxu0
        %694 = vdwg.mxu0
        %695 = vrot.lane.b32.xlu0 %v501, 64
        %v696 = vpop.permute.xlu0 %695
        %698 = vxpose.xlu0.b32.start [1/16] %v696, 128
        %699 = vxpose.xlu0.b32.cont [2/16] 0.0, 128
        %700 = vxpose.xlu0.b32.cont [3/16] 0.0, 128
        %701 = vxpose.xlu0.b32.cont [4/16] 0.0, 128
        %702 = vxpose.xlu0.b32.cont [5/16] 0.0, 128
        %703 = vxpose.xlu0.b32.cont [6/16] 0.0, 128
        %704 = vxpose.xlu0.b32.cont [7/16] 0.0, 128
        %705 = vxpose.xlu0.b32.cont [8/16] 0.0, 128
        %706 = vxpose.xlu0.b32.cont [9/16] 0.0, 128
        %707 = vxpose.xlu0.b32.cont [10/16] 0.0, 128
        %708 = vxpose.xlu0.b32.cont [11/16] 0.0, 128
        %709 = vxpose.xlu0.b32.cont [12/16] 0.0, 128
        %710 = vxpose.xlu0.b32.cont [13/16] 0.0, 128
        %711 = vxpose.xlu0.b32.cont [14/16] 0.0, 128
        %712 = vxpose.xlu0.b32.cont [15/16] 0.0, 128
        %713 = vxpose.xlu0.b32.end [16/16] 0.0, 128
        %v714 = vpop.trf.xlu0
        %v715 = vpop.trf.xlu0
        %v716 = vpop.trf.xlu0
        %v717 = vpop.trf.xlu0
        %v718 = vpop.trf.xlu0
        %v719 = vpop.trf.xlu0
        %v720 = vpop.trf.xlu0
        %v721 = vpop.trf.xlu0
        %v722 = vpop.trf.xlu0
        %v723 = vpop.trf.xlu0
        %v724 = vpop.trf.xlu0
        %v725 = vpop.trf.xlu0
        %v726 = vpop.trf.xlu0
        %v727 = vpop.trf.xlu0
        %v728 = vpop.trf.xlu0
        %v729 = vpop.trf.xlu0
        %v730 = vpack.c.bf16 %v715, %v714
        %v731 = vpack.c.bf16 %v717, %v716
        %732 = vrot.lane.b32.xlu0 %v518, 64
        %v733 = vpop.permute.xlu0 %732
        %v735 = vsel %vm554, %v733, 0
        %737 = vmatpush.bf16.msra.mxu0 0
        %738 = vmatpush.bf16.msra.mxu0 0
        %739 = vmatpush.bf16.msra.mxu0 0
        %740 = vmatpush.bf16.msra.mxu0 0
        %741 = vmatpush.bf16.msra.mxu0 0
        %742 = vmatpush.bf16.msra.mxu0 0
        %743 = vmatpush.bf16.msra.mxu0 %v731
        %744 = vmatpush.bf16.msra.mxu0 %v730
        %745 = vmatmul.bf16.gmra.mxu0 %v735
        %v746 = vpop.f32.mrf.mxu0
        %v747 = vadd.f32 0.0, %v746
        %v748 = vpop.f32.mrf.mxu0
        %749 = vdwg.mxu0
        %v750 = vsel %vm571, %v747, -inf
        %751 = vmax.xlane.f32.xlu0 %v750
        %v752 = vpop.xlane.xlu0 %751
        %v753 = vsub.f32 %v747, %v752
        %v754 = vmul.f32 %v753, 1.442695
        %v755 = vpow.pop %v754
        %v756 = vsel %vm571, %v755, 0.0
        %757 = vadd.xlane.f32.xlu0 %v756
        %v758 = vpop.xlane.xlu0 %757
        %v759 = vrcp.pop %v758
        %v760 = vmul.f32 %v755, %v759
        %v761 = vpack.c.bf16 %v760, %v760
        %762 = vrot.lane.b32.xlu0 %v553, 64
        %v763 = vpop.permute.xlu0 %762
        %v765 = vsel %vm571, %v761, 0
        %v768 = vsel %vm587, %v763, 0
        %770 = vmatpush.bf16.msra.mxu0 0
        %771 = vmatpush.bf16.msra.mxu0 0
        %772 = vmatpush.bf16.msra.mxu0 0
        %773 = vmatpush.bf16.msra.mxu0 0
        %774 = vmatpush.bf16.msra.mxu0 0
        %775 = vmatpush.bf16.msra.mxu0 0
        %776 = vmatpush.bf16.msra.mxu0 0
        %777 = vmatpush.bf16.msra.mxu0 %v768
        %778 = vmatmul.bf16.gmra.mxu0 %v765
        %v779 = vpop.f32.mrf.mxu0
        %v780 = vadd.f32 0.0, %v779
        %v781 = vpop.f32.mrf.mxu0
        %782 = vdwg.mxu0
        %783 = vrot.lane.b32.xlu0 %v501, 32
        %v784 = vpop.permute.xlu0 %783
        %786 = vxpose.xlu0.b32.start [1/16] %v784, 128
        %787 = vxpose.xlu0.b32.cont [2/16] 0.0, 128
        %788 = vxpose.xlu0.b32.cont [3/16] 0.0, 128
        %789 = vxpose.xlu0.b32.cont [4/16] 0.0, 128
        %790 = vxpose.xlu0.b32.cont [5/16] 0.0, 128
        %791 = vxpose.xlu0.b32.cont [6/16] 0.0, 128
        %792 = vxpose.xlu0.b32.cont [7/16] 0.0, 128
        %793 = vxpose.xlu0.b32.cont [8/16] 0.0, 128
        %794 = vxpose.xlu0.b32.cont [9/16] 0.0, 128
        %795 = vxpose.xlu0.b32.cont [10/16] 0.0, 128
        %796 = vxpose.xlu0.b32.cont [11/16] 0.0, 128
        %797 = vxpose.xlu0.b32.cont [12/16] 0.0, 128
        %798 = vxpose.xlu0.b32.cont [13/16] 0.0, 128
        %799 = vxpose.xlu0.b32.cont [14/16] 0.0, 128
        %800 = vxpose.xlu0.b32.cont [15/16] 0.0, 128
        %801 = vxpose.xlu0.b32.end [16/16] 0.0, 128
        %v802 = vpop.trf.xlu0
        %v803 = vpop.trf.xlu0
        %v804 = vpop.trf.xlu0
        %v805 = vpop.trf.xlu0
        %v806 = vpop.trf.xlu0
        %v807 = vpop.trf.xlu0
        %v808 = vpop.trf.xlu0
        %v809 = vpop.trf.xlu0
        %v810 = vpop.trf.xlu0
        %v811 = vpop.trf.xlu0
        %v812 = vpop.trf.xlu0
        %v813 = vpop.trf.xlu0
        %v814 = vpop.trf.xlu0
        %v815 = vpop.trf.xlu0
        %v816 = vpop.trf.xlu0
        %v817 = vpop.trf.xlu0
        %v818 = vpack.c.bf16 %v803, %v802
        %v819 = vpack.c.bf16 %v805, %v804
        %820 = vrot.lane.b32.xlu0 %v518, 32
        %v821 = vpop.permute.xlu0 %820
        %v823 = vsel %vm554, %v821, 0
        %825 = vmatpush.bf16.msra.mxu0 0
        %826 = vmatpush.bf16.msra.mxu0 0
        %827 = vmatpush.bf16.msra.mxu0 0
        %828 = vmatpush.bf16.msra.mxu0 0
        %829 = vmatpush.bf16.msra.mxu0 0
        %830 = vmatpush.bf16.msra.mxu0 0
        %831 = vmatpush.bf16.msra.mxu0 %v819
        %832 = vmatpush.bf16.msra.mxu0 %v818
        %833 = vmatmul.bf16.gmra.mxu0 %v823
        %v834 = vpop.f32.mrf.mxu0
        %v835 = vadd.f32 0.0, %v834
        %v836 = vpop.f32.mrf.mxu0
        %837 = vdwg.mxu0
        %v838 = vsel %vm571, %v835, -inf
        %839 = vmax.xlane.f32.xlu0 %v838
        %v840 = vpop.xlane.xlu0 %839
        %v841 = vsub.f32 %v835, %v840
        %v842 = vmul.f32 %v841, 1.442695
        %v843 = vpow.pop %v842
        %v844 = vsel %vm571, %v843, 0.0
        %845 = vadd.xlane.f32.xlu0 %v844
        %v846 = vpop.xlane.xlu0 %845
        %v847 = vrcp.pop %v846
        %v848 = vmul.f32 %v843, %v847
        %v849 = vpack.c.bf16 %v848, %v848
        %850 = vrot.lane.b32.xlu0 %v553, 32
        %v851 = vpop.permute.xlu0 %850
        %v853 = vsel %vm571, %v849, 0
        %v856 = vsel %vm587, %v851, 0
        %858 = vmatpush.bf16.msra.mxu0 0
        %859 = vmatpush.bf16.msra.mxu0 0
        %860 = vmatpush.bf16.msra.mxu0 0
        %861 = vmatpush.bf16.msra.mxu0 0
        %862 = vmatpush.bf16.msra.mxu0 0
        %863 = vmatpush.bf16.msra.mxu0 0
        %864 = vmatpush.bf16.msra.mxu0 0
        %865 = vmatpush.bf16.msra.mxu0 %v856
        %866 = vmatmul.bf16.gmra.mxu0 %v853
        %v867 = vpop.f32.mrf.mxu0
        %v868 = vadd.f32 0.0, %v867
        %v869 = vpop.f32.mrf.mxu0
        %870 = vdwg.mxu0
        %872 = vrot.lane.b32.xlu0 %v692, 32
        %v873 = vpop.permute.xlu0 %872
        %876 = vrot.lane.b32.xlu0 %v780, 64
        %v877 = vpop.permute.xlu0 %876
        %880 = vrot.lane.b32.xlu0 %v868, 96
        %v881 = vpop.permute.xlu0 %880
        %v883 = vsel %vm554, %v601, %v873
        %vm884 = vcmask 523264
        %v885 = vsel %vm884, %v883, %v877
        %vm886 = vcmask 785408
        %v887 = vsel %vm886, %v885, %v881
        %v888 = vpack.c.bf16 %v887, %v887
        %v889 = vld [vmem:[#allocation10] sm:$0xff]
        %v890 = vld [vmem:[#allocation10 + $0x8] sm:$0xff]
        %v891 = vld [vmem:[#allocation10 + $0x10] sm:$0xff]
        %v892 = vld [vmem:[#allocation10 + $0x18] sm:$0xff]
        %v893 = vld [vmem:[#allocation10 + $0x20] sm:$0xff]
        %v894 = vld [vmem:[#allocation10 + $0x28] sm:$0xff]
        %v895 = vld [vmem:[#allocation10 + $0x30] sm:$0xff]
        %v896 = vld [vmem:[#allocation10 + $0x38] sm:$0xff]
        %v897 = vld [vmem:[#allocation10 + $0x40] sm:$0xff]
        %v898 = vld [vmem:[#allocation10 + $0x48] sm:$0xff]
        %v899 = vld [vmem:[#allocation10 + $0x50] sm:$0xff]
        %v900 = vld [vmem:[#allocation10 + $0x58] sm:$0xff]
        %v901 = vld [vmem:[#allocation10 + $0x60] sm:$0xff]
        %v902 = vld [vmem:[#allocation10 + $0x68] sm:$0xff]
        %v903 = vld [vmem:[#allocation10 + $0x70] sm:$0xff]
        %v904 = vld [vmem:[#allocation10 + $0x78] sm:$0xff]
        %v905 = vpack.c.bf16 %v890, %v889
        %v906 = vpack.c.bf16 %v892, %v891
        %v907 = vpack.c.bf16 %v894, %v893
        %v908 = vpack.c.bf16 %v896, %v895
        %v909 = vpack.c.bf16 %v898, %v897
        %v910 = vpack.c.bf16 %v900, %v899
        %v911 = vpack.c.bf16 %v902, %v901
        %v912 = vpack.c.bf16 %v904, %v903
        %v913 = vld [vmem:[%s6] sm:$0x1]
        %v915 = vperm.slane %v913, 0
        %917 = vmatpush.bf16.msra.mxu0 %v912
        %918 = vmatpush.bf16.msra.mxu0 %v911
        %919 = vmatpush.bf16.msra.mxu0 %v910
        %920 = vmatpush.bf16.msra.mxu0 %v909
        %921 = vmatpush.bf16.msra.mxu0 %v908
        %922 = vmatpush.bf16.msra.mxu0 %v907
        %923 = vmatpush.bf16.msra.mxu0 %v906
        %924 = vmatpush.bf16.msra.mxu0 %v905
        %925 = vmatmul.bf16.gmra.mxu0 %v888
        %v926 = vpop.f32.mrf.mxu0
        %v927 = vadd.f32 %v915, %v926
        %v928 = vpop.f32.mrf.mxu0
        %929 = vdwg.mxu0
        %930 = vst [vmem:[%s357] sm:$0xff] %v927
        %s931 = sand.u32 %s186, 1
        %s932 = scalar_lea.sflag [#allocation4], %s931
        %s933 = sand.u32 %s186, 1
        %s934 = smul.addr %s933, 8
        %s935 = scalar_lea.vmem [#allocation11], %s934
        // Predicated region
        $region69: #{tpu_custom_call.1} parent=47 // pred_check
          %p936 = pneg %p196
        $region70: #{tpu_custom_call.1} parent=47 // pred_check_branch
          %938 = sbr.rel (%p936) target = $region72
        $region71: #{tpu_custom_call.1} parent=47 // pred_region
          %940 = vsyncadd %s932, 0
          %s941 = smul.addr %s26, 8
          %s942 = scalar_lea.hbm %s7, %s941
          %s944 = sshll.u32 %s935, 4
          %s945 = int_to_ptr.vmem [resolvable:$true] %s944
          %s946 = sshll.u32 %s942, 4
          %s947 = int_to_ptr.hbm [resolvable:$true] %s946
          %949 = dma.vmem_to_hbm [thread:$0]  %s945, 128, %s947, %s932
        $region72: #{tpu_custom_call.1} parent=47 // pred_fallthru
          _
      $region48: #{tpu_custom_call.1} parent=5 // pred_fallthru
        _
      %p950 = scmp.le.s32.totalorder 2, %s21
      // Predicated region
      $region73: #{tpu_custom_call.1} parent=5 // pred_check
        %p951 = pneg %p950
      $region74: #{tpu_custom_call.1} parent=5 // pred_check_branch
        %953 = sbr.rel (%p951) target = $region76
      $region75: #{tpu_custom_call.1} parent=5 // pred_region
        %s954 = ssub.s32 %s21, 2
        // Predicated region
        $region77: #{tpu_custom_call.1} parent=75 // pred_check
          %p955 = pneg %p202
        $region78: #{tpu_custom_call.1} parent=75 // pred_check_branch
          %957 = sbr.rel (%p955) target = $region80
        $region79: #{tpu_custom_call.1} parent=75 // pred_region
          %s958 = sand.u32 %s187, 1
          %s959 = scalar_lea.sflag [#allocation4], %s958
          %s960 = sand.u32 %s187, 1
          %s961 = smul.addr %s960, 8
          %s962 = scalar_lea.vmem [#allocation11], %s961
          %964 = dma.done %s959, 128
        $region80: #{tpu_custom_call.1} parent=75 // pred_fallthru
          _
      $region76: #{tpu_custom_call.1} parent=5 // pred_fallthru
        _
    $region6: #{tpu_custom_call.1} parent=1 // loop_footer
      %s25 = sadd.s32 1, %s21
    $region7: #{tpu_custom_call.1} parent=1 // loop_footer_branch
      %20 = sbr.rel target = $region3
    $region8: #{tpu_custom_call.1} parent=1 // loop_exit
      _
    %965 = vsyncpa [#allocation3], 1
    %s966 = scalar_lea.sflag [#allocation3], 1
    %967 = vsyncpa %s966, 1
    %968 = vsyncpa [#allocation6], 1
    %969 = vsyncpa [#allocation9], 1
    %970 = vsyncpa [#allocation4], 1
    %s971 = scalar_lea.sflag [#allocation4], 1
    %972 = vsyncpa %s971, 1

</llo_original>
